<compile_context>
chip_gen: v7x
topology: tpu7x:2x2x1
jax: 0.10.0
libtpu: 0.0.40
codegen_flags: <defaults>
</compile_context>

<pallas_src>
import math

import jax
import jax.numpy as jnp
from jax.experimental import pallas as pl
from jax.experimental.pallas import tpu as pltpu

_IN = 4                 # fc1 input width
_HIDDEN = 32            # fc1 output width
_GROUP = 32             # original rows packed per 128-lane group (32 * 4 = 128)
_TILE_M_MAX = 2048      # packed rows per grid step: 2048 * 128 * 4 B = 1 MiB of x
_VMEM_LIMIT = 48 * 1024 * 1024   # fits v7x's 64 MiB/TC; raised past v5e's 16 MiB default


def _mlp_kernel(xp_ref, a_ref, b1_ref, r_ref, b2_ref, o_ref):
    """One packed tile: o = relu(xp @ A + b1_tiled) @ R + b2.

    xp_ref: (tile_m, 128)   32 original rows per packed row (natural x layout)
    a_ref : (128, 1024)     block-diagonal fc1 weight, kron(I_32, W1); VMEM-resident
    b1_ref: (1, 1024)       fc1 bias tiled 32x; VMEM-resident
    r_ref : (1024, 32)      block-diagonal fc2 weight, kron(I_32, w2); VMEM-resident
    b2_ref: (1,)            fc2 bias scalar in SMEM
    o_ref : (tile_m, 32)    packed output; row-major identical to (32*tile_m, 1)
    """
    # fc1 on the MXU; the block-diagonal A lets the input stay in its natural
    # packed layout (no transpose pass over HBM before the kernel).
    h = jnp.dot(xp_ref[...], a_ref[...], preferred_element_type=jnp.float32)
    h = jnp.maximum(h + b1_ref[...], 0.0)                       # bias + ReLU (VPU)
    # fc2 also on the MXU (removes the per-row multiply and the cross-sublane
    # reduce that previously loaded the VALU/XLU slots).
    y = jnp.dot(h, r_ref[...], preferred_element_type=jnp.float32) + b2_ref[0]
    o_ref[...] = y.astype(o_ref.dtype)


def net_forward(x, w1, b1, w2, b2):
    """x: (..., 4) -> (..., 1); equivalent to Net.forward (fc1 -> ReLU -> fc2)."""
    assert x.shape[-1] == _IN
    lead_shape = x.shape[:-1]
    n = math.prod(lead_shape) if lead_shape else 1
    if n == 0:                                   # guard: empty batch
        return jnp.zeros((*lead_shape, 1), jnp.float32)

    x2d = x.reshape(n, _IN).astype(jnp.float32)  # free (row-major)

    # Pack 32 rows per 128-lane group.  For n % 32 == 0 (e.g. the training
    # pipeline's 128 x 200 batches) this reshape is a pure relayout-free
    # bitcast.  Otherwise a <= 31 row pad is the only copy in the pipeline.
    n_grp = ((n + _GROUP - 1) // _GROUP) * _GROUP
    if n_grp != n:
        x2d = jnp.pad(x2d, ((0, n_grp - n), (0, 0)))
    m = n_grp // _GROUP
    x_pk = x2d.reshape(m, _GROUP * _IN)          # (m, 128), free

    # Block-diagonal weights (built once, < 1 MiB total, VMEM-resident across
    # all grid steps via constant index_maps).
    w1f = w1.reshape(_IN, _HIDDEN).astype(jnp.float32)
    w2f = w2.reshape(_HIDDEN, 1).astype(jnp.float32)
    eye = jnp.eye(_GROUP, dtype=jnp.float32)
    a_blk = jnp.kron(eye, w1f)                   # (128, 1024)
    r_blk = jnp.kron(eye, w2f)                   # (1024, 32)
    b1t = jnp.tile(b1.reshape(1, _HIDDEN).astype(jnp.float32), (1, _GROUP))
    b2s = b2.reshape(1).astype(jnp.float32)      # SMEM scalar

    # Tile the packed-row axis (1 packed row = 32 original rows).
    # TODO(synk): sweep tile_m in {1024..4096} on real HW and optionally cast
    # x / A / R to bfloat16 on v6e/v7x (f32 accumulation already requested).
    tile_m = min(_TILE_M_MAX, m)
    if m >= 16 and pl.cdiv(m, tile_m) < 2:
        # Give the "parallel" grid axis >= 2 steps so v7x megacore has work.
        tile_m = ((pl.cdiv(m, 2) + 7) // 8) * 8
    num_tiles = pl.cdiv(m, tile_m)

    out = pl.pallas_call(
        _mlp_kernel,
        out_shape=jax.ShapeDtypeStruct((m, _GROUP), jnp.float32),
        grid_spec=pltpu.PrefetchScalarGridSpec(
            num_scalar_prefetch=0,
            grid=(num_tiles,),
            in_specs=[
                # x tile marches along packed rows; Pallas double-buffers it so
                # the DMA of tile i+1 overlaps compute of tile i.  The partial
                # last block needs no host-side pad: its OOB rows never feed an
                # in-bounds output row.
                pl.BlockSpec((tile_m, _GROUP * _IN), lambda i: (i, 0)),
                # Weights / biases: constant index_map -> fetched once, resident.
                pl.BlockSpec((_GROUP * _IN, _GROUP * _HIDDEN), lambda i: (0, 0)),
                pl.BlockSpec((1, _GROUP * _HIDDEN), lambda i: (0, 0)),
                pl.BlockSpec((_GROUP * _HIDDEN, _GROUP), lambda i: (0, 0)),
                # fc2 bias scalar in SMEM.
                pl.BlockSpec(memory_space=pltpu.MemorySpace.SMEM),
            ],
            out_specs=pl.BlockSpec((tile_m, _GROUP), lambda i: (i, 0)),
        ),
        compiler_params=pltpu.CompilerParams(
            # Independent row tiles -> megacore sharding on v7x (2 TCs);
            # neutral on single-core v5e/v6e.
            dimension_semantics=("parallel",),
            vmem_limit_bytes=_VMEM_LIMIT,
        ),
    )(x_pk, a_blk, b1t, r_blk, b2s)

    # (m, 32) row-major has the same linear layout as (32*m, 1): this reshape
    # is free; the row slice only happens on the rare n % 32 != 0 path.
    y = out.reshape(n_grp, 1)
    if n_grp != n:
        y = y[:n]
    return y.reshape(*lead_shape, 1)


def init_params(key):
    """Deterministic init mimicking nn.Linear default (uniform +/- 1/sqrt(fan_in))."""
    k1, k2, k3, k4 = jax.random.split(key, 4)
    lim1 = 1.0 / jnp.sqrt(4.0)
    lim2 = 1.0 / jnp.sqrt(32.0)
    w1 = jax.random.uniform(k1, (4, 32), jnp.float32, -lim1, lim1)
    b1 = jax.random.uniform(k2, (1, 32), jnp.float32, -lim1, lim1)
    w2 = jax.random.uniform(k3, (32, 1), jnp.float32, -lim2, lim2)
    b2 = jax.random.uniform(k4, (1, 1), jnp.float32, -lim2, lim2)
    return w1, b1, w2, b2


if __name__ == "__main__":
    key = jax.random.PRNGKey(0)
    k_param, k_x1, k_x2 = jax.random.split(key, 3)
    w1, b1, w2, b2 = init_params(k_param)

    def ref_fn(x):
        # Reference in plain JAX (same math as Net.forward).
        return jnp.maximum(x @ w1 + b1, 0.0) @ w2 + b2

    # Small example consistent with the training pipeline's
    # (batch, particleLimit, 4) batches: batch=2, particles=8, features=4.
    x_small = jax.random.normal(k_x1, (2, 8, 4), jnp.float32)
    out_small = jax.block_until_ready(net_forward(x_small, w1, b1, w2, b2))
    assert out_small.shape == (2, 8, 1)
    assert jnp.allclose(out_small, ref_fn(x_small), atol=1e-5, rtol=1e-5)

    # Second shape exercising the multi-tile grid and the partial last block
    # (n = 800 rows -> m = 25 packed rows -> 2 grid steps, second one partial).
    x_multi = jax.random.normal(k_x2, (4, 200, 4), jnp.float32)
    out_multi = jax.block_until_ready(net_forward(x_multi, w1, b1, w2, b2))
    assert out_multi.shape == (4, 200, 1)
    assert jnp.allclose(out_multi, ref_fn(x_multi), atol=1e-5, rtol=1e-5)

    print("KERNEL_OK")
</pallas_src>

<mosaic_0001>
module attributes {stable_mosaic.version = 11 : i64} {
  func.func @_mlp_kernel(%arg0: i32, %arg1: memref<1x128xf32, #tpu.memory_space<vmem>>, %arg2: memref<128x1024xf32, #tpu.memory_space<vmem>>, %arg3: memref<1x1024xf32, #tpu.memory_space<vmem>>, %arg4: memref<1024x32xf32, #tpu.memory_space<vmem>>, %arg5: memref<1xf32, #tpu.memory_space<smem>>, %arg6: memref<1x32xf32, #tpu.memory_space<vmem>>) attributes {dimension_semantics = [#tpu.dimension_semantics<parallel>], iteration_bounds = array<i64: 1>, scalar_prefetch = 0 : i64, scratch_operands = 0 : i64, tpu.core_type = #tpu.core_type<tc>, window_params = [{transform_indices = @transform_0, window_bounds = array<i64: 1, 128>}, {pipeline_mode = #tpu.pipeline_mode<synchronous>, transform_indices = @transform_1, window_bounds = array<i64: 128, 1024>}, {pipeline_mode = #tpu.pipeline_mode<synchronous>, transform_indices = @transform_2, window_bounds = array<i64: 1, 1024>}, {pipeline_mode = #tpu.pipeline_mode<synchronous>, transform_indices = @transform_3, window_bounds = array<i64: 1024, 32>}, {transform_indices = @transform_4, window_bounds = array<i64: 1>}, {transform_indices = @transform_5, window_bounds = array<i64: 1, 32>}]} {
    %c0 = arith.constant 0 : index
    %c0_0 = arith.constant 0 : index
    %0 = vector.load %arg1[%c0, %c0_0] : memref<1x128xf32, #tpu.memory_space<vmem>>, vector<1x128xf32>
    %c0_1 = arith.constant 0 : index
    %c0_2 = arith.constant 0 : index
    %1 = vector.load %arg2[%c0_1, %c0_2] : memref<128x1024xf32, #tpu.memory_space<vmem>>, vector<128x1024xf32>
    %cst = arith.constant dense<0.000000e+00> : vector<1x1024xf32>
    %2 = tpu.matmul %0, %1, %cst {dimension_numbers = #tpu.dot_dimension_numbers<[1], [0], [0], [1], [0, 0, 1, 1], [], []>} : vector<1x128xf32>, vector<128x1024xf32>, vector<1x1024xf32> -> vector<1x1024xf32>
    %c0_3 = arith.constant 0 : index
    %c0_4 = arith.constant 0 : index
    %3 = vector.load %arg3[%c0_3, %c0_4] : memref<1x1024xf32, #tpu.memory_space<vmem>>, vector<1x1024xf32>
    %4 = arith.addf %2, %3 : vector<1x1024xf32>
    %cst_5 = arith.constant 0.000000e+00 : f32
    %5 = vector.broadcast %cst_5 : f32 to vector<1x1024xf32>
    %6 = arith.maximumf %4, %5 : vector<1x1024xf32>
    %c0_6 = arith.constant 0 : index
    %c0_7 = arith.constant 0 : index
    %7 = vector.load %arg4[%c0_6, %c0_7] : memref<1024x32xf32, #tpu.memory_space<vmem>>, vector<1024x32xf32>
    %cst_8 = arith.constant dense<0.000000e+00> : vector<1x32xf32>
    %8 = tpu.matmul %6, %7, %cst_8 {dimension_numbers = #tpu.dot_dimension_numbers<[1], [0], [0], [1], [0, 0, 1, 1], [], []>} : vector<1x1024xf32>, vector<1024x32xf32>, vector<1x32xf32> -> vector<1x32xf32>
    %c0_9 = arith.constant 0 : index
    %9 = memref.load %arg5[%c0_9] : memref<1xf32, #tpu.memory_space<smem>>
    %10 = vector.broadcast %9 : f32 to vector<1x32xf32>
    %11 = arith.addf %8, %10 : vector<1x32xf32>
    %c0_10 = arith.constant 0 : index
    %c0_11 = arith.constant 0 : index
    %12 = vector.load %arg6[%c0_10, %c0_11] : memref<1x32xf32, #tpu.memory_space<vmem>>, vector<1x32xf32>
    tpu.vector_store %arg6[%c0_10, %c0_11], %11 {strides = array<i32>} : memref<1x32xf32, #tpu.memory_space<vmem>>, vector<1x32xf32>,
    return
  }
  func.func @transform_0(%arg0: i32) -> (i32, i32) {
    %c0_i32 = arith.constant 0 : i32
    %c0_i32_0 = arith.constant 0 : i32
    return %arg0, %c0_i32 : i32, i32
  }
  func.func @transform_1(%arg0: i32) -> (i32, i32) {
    %c0_i32 = arith.constant 0 : i32
    %c0_i32_0 = arith.constant 0 : i32
    %c0_i32_1 = arith.constant 0 : i32
    return %c0_i32, %c0_i32_0 : i32, i32
  }
  func.func @transform_2(%arg0: i32) -> (i32, i32) {
    %c0_i32 = arith.constant 0 : i32
    %c0_i32_0 = arith.constant 0 : i32
    %c0_i32_1 = arith.constant 0 : i32
    return %c0_i32, %c0_i32_0 : i32, i32
  }
  func.func @transform_3(%arg0: i32) -> (i32, i32) {
    %c0_i32 = arith.constant 0 : i32
    %c0_i32_0 = arith.constant 0 : i32
    %c0_i32_1 = arith.constant 0 : i32
    return %c0_i32, %c0_i32_0 : i32, i32
  }
  func.func @transform_4(%arg0: i32) -> i32 {
    %c0_i32 = arith.constant 0 : i32
    %c0_i32_0 = arith.constant 0 : i32
    return %c0_i32 : i32
  }
  func.func @transform_5(%arg0: i32) -> (i32, i32) {
    %c0_i32 = arith.constant 0 : i32
    %c0_i32_0 = arith.constant 0 : i32
    return %arg0, %c0_i32 : i32, i32
  }
}

</mosaic_0001>

<llo_original>
// kernel: tpu_custom_call.1
$region0: #{tpu_custom_call.1}
  #allocation0 [shape = 'u32[]', space=smem, size = 0x4, offset = 0x4, fixed_abs, tag = 'smem constant byte address 0x4 - core index']
  #allocation1 [shape = 'u32[144,128]{1,0:T(1,128)}', space=vmem, size = 0x12000, scoped, tag = 'internal scratch']
  #allocation2 [shape = 'f32[1]{0:T(128)S(6)}', space=smem, size = 0x200, scoped, tag = 'scoped memory for tpu_custom_call.1']
  %s0 = inlined_call_operand.vmem [shape: f32[1,128], index: 0, kind: input, shape index: {}]
  %s1 = inlined_call_operand.vmem [shape: f32[128,1024], index: 1, kind: input, shape index: {}]
  %s2 = inlined_call_operand.vmem [shape: f32[1,1024], index: 2, kind: input, shape index: {}]
  %s3 = inlined_call_operand.vmem [shape: f32[1024,32], index: 3, kind: input, shape index: {}]
  %s4 = inlined_call_operand.<no memory space> [shape: f32[1], index: 4, kind: input, shape index: {}]
  %s5 = inlined_call_operand.hbm [shape: f32[1,32], index: 5, kind: output, shape index: {}]
  %s6 = sld [smem:[#allocation0]]
  $region30: #{tpu_custom_call.1} parent=0
    _
  %s8 = ssub.s32 1, %s6
  %s9 = scalar_select 0, %s8, %s6
  %10 = sst [smem:[#allocation2]] %s4
  $region1: #{tpu_custom_call.1} parent=0
    #allocation3 [shape = 'u8[512]{0}', space=vmem, size = 0x400, scoped, tag = 'output window, operand 0, single buffered']
    #allocation4 [shape = 's32[1]{0}', space=sflag, size = 0x4, scoped, tag = 'scoped memory for tpu_custom_call.1']
    %11 = vsyncpa [#allocation4], 0
    // Predicated region
    $region2: #{tpu_custom_call.1} parent=1 // pred_check
      _
    $region3: #{tpu_custom_call.1} parent=1 // pred_check_branch
      %13 = sbr.rel (0) target = $region5
    $region4: #{tpu_custom_call.1} parent=1 // pred_region
      _
    $region5: #{tpu_custom_call.1} parent=1 // pred_fallthru
      _
    // Predicated region
    $region6: #{tpu_custom_call.1} parent=1 // pred_check
      _
    $region7: #{tpu_custom_call.1} parent=1 // pred_check_branch
      %15 = sbr.rel (0) target = $region9
    $region8: #{tpu_custom_call.1} parent=1 // pred_region
      _
    $region9: #{tpu_custom_call.1} parent=1 // pred_fallthru
      _
    // Predicated region
    $region10: #{tpu_custom_call.1} parent=1 // pred_check
      _
    $region11: #{tpu_custom_call.1} parent=1 // pred_check_branch
      %17 = sbr.rel (0) target = $region13
    $region12: #{tpu_custom_call.1} parent=1 // pred_region
      _
    $region13: #{tpu_custom_call.1} parent=1 // pred_fallthru
      _
    // Predicated region
    $region14: #{tpu_custom_call.1} parent=1 // pred_check
      _
    $region15: #{tpu_custom_call.1} parent=1 // pred_check_branch
      %19 = sbr.rel (0) target = $region17
    $region16: #{tpu_custom_call.1} parent=1 // pred_region
      _
    $region17: #{tpu_custom_call.1} parent=1 // pred_fallthru
      _
    // Predicated region
    $region18: #{tpu_custom_call.1} parent=1 // pred_check
      _
    $region19: #{tpu_custom_call.1} parent=1 // pred_check_branch
      %21 = sbr.rel (0) target = $region21
    $region20: #{tpu_custom_call.1} parent=1 // pred_region
      _
    $region21: #{tpu_custom_call.1} parent=1 // pred_fallthru
      _
    %v22 = vld [vmem:[%s0] sm:$0x1]
    %v23 = vld [vmem:[%s1] sm:$0xff]
    %v24 = vld [vmem:[%s1 + $0x8] sm:$0xff]
    %v25 = vld [vmem:[%s1 + $0x10] sm:$0xff]
    %v26 = vld [vmem:[%s1 + $0x18] sm:$0xff]
    %v27 = vld [vmem:[%s1 + $0x20] sm:$0xff]
    %v28 = vld [vmem:[%s1 + $0x28] sm:$0xff]
    %v29 = vld [vmem:[%s1 + $0x30] sm:$0xff]
    %v30 = vld [vmem:[%s1 + $0x38] sm:$0xff]
    %v31 = vld [vmem:[%s1 + $0x40] sm:$0xff]
    %v32 = vld [vmem:[%s1 + $0x48] sm:$0xff]
    %v33 = vld [vmem:[%s1 + $0x50] sm:$0xff]
    %v34 = vld [vmem:[%s1 + $0x58] sm:$0xff]
    %v35 = vld [vmem:[%s1 + $0x60] sm:$0xff]
    %v36 = vld [vmem:[%s1 + $0x68] sm:$0xff]
    %v37 = vld [vmem:[%s1 + $0x70] sm:$0xff]
    %v38 = vld [vmem:[%s1 + $0x78] sm:$0xff]
    %v39 = vld [vmem:[%s1 + $0x80] sm:$0xff]
    %v40 = vld [vmem:[%s1 + $0x88] sm:$0xff]
    %v41 = vld [vmem:[%s1 + $0x90] sm:$0xff]
    %v42 = vld [vmem:[%s1 + $0x98] sm:$0xff]
    %v43 = vld [vmem:[%s1 + $0xa0] sm:$0xff]
    %v44 = vld [vmem:[%s1 + $0xa8] sm:$0xff]
    %v45 = vld [vmem:[%s1 + $0xb0] sm:$0xff]
    %v46 = vld [vmem:[%s1 + $0xb8] sm:$0xff]
    %v47 = vld [vmem:[%s1 + $0xc0] sm:$0xff]
    %v48 = vld [vmem:[%s1 + $0xc8] sm:$0xff]
    %v49 = vld [vmem:[%s1 + $0xd0] sm:$0xff]
    %v50 = vld [vmem:[%s1 + $0xd8] sm:$0xff]
    %v51 = vld [vmem:[%s1 + $0xe0] sm:$0xff]
    %v52 = vld [vmem:[%s1 + $0xe8] sm:$0xff]
    %v53 = vld [vmem:[%s1 + $0xf0] sm:$0xff]
    %v54 = vld [vmem:[%s1 + $0xf8] sm:$0xff]
    %v55 = vld [vmem:[%s1 + $0x100] sm:$0xff]
    %v56 = vld [vmem:[%s1 + $0x108] sm:$0xff]
    %v57 = vld [vmem:[%s1 + $0x110] sm:$0xff]
    %v58 = vld [vmem:[%s1 + $0x118] sm:$0xff]
    %v59 = vld [vmem:[%s1 + $0x120] sm:$0xff]
    %v60 = vld [vmem:[%s1 + $0x128] sm:$0xff]
    %v61 = vld [vmem:[%s1 + $0x130] sm:$0xff]
    %v62 = vld [vmem:[%s1 + $0x138] sm:$0xff]
    %v63 = vld [vmem:[%s1 + $0x140] sm:$0xff]
    %v64 = vld [vmem:[%s1 + $0x148] sm:$0xff]
    %v65 = vld [vmem:[%s1 + $0x150] sm:$0xff]
    %v66 = vld [vmem:[%s1 + $0x158] sm:$0xff]
    %v67 = vld [vmem:[%s1 + $0x160] sm:$0xff]
    %v68 = vld [vmem:[%s1 + $0x168] sm:$0xff]
    %v69 = vld [vmem:[%s1 + $0x170] sm:$0xff]
    %v70 = vld [vmem:[%s1 + $0x178] sm:$0xff]
    %v71 = vld [vmem:[%s1 + $0x180] sm:$0xff]
    %v72 = vld [vmem:[%s1 + $0x188] sm:$0xff]
    %v73 = vld [vmem:[%s1 + $0x190] sm:$0xff]
    %v74 = vld [vmem:[%s1 + $0x198] sm:$0xff]
    %v75 = vld [vmem:[%s1 + $0x1a0] sm:$0xff]
    %v76 = vld [vmem:[%s1 + $0x1a8] sm:$0xff]
    %v77 = vld [vmem:[%s1 + $0x1b0] sm:$0xff]
    %v78 = vld [vmem:[%s1 + $0x1b8] sm:$0xff]
    %v79 = vld [vmem:[%s1 + $0x1c0] sm:$0xff]
    %v80 = vld [vmem:[%s1 + $0x1c8] sm:$0xff]
    %v81 = vld [vmem:[%s1 + $0x1d0] sm:$0xff]
    %v82 = vld [vmem:[%s1 + $0x1d8] sm:$0xff]
    %v83 = vld [vmem:[%s1 + $0x1e0] sm:$0xff]
    %v84 = vld [vmem:[%s1 + $0x1e8] sm:$0xff]
    %v85 = vld [vmem:[%s1 + $0x1f0] sm:$0xff]
    %v86 = vld [vmem:[%s1 + $0x1f8] sm:$0xff]
    %v87 = vld [vmem:[%s1 + $0x200] sm:$0xff]
    %v88 = vld [vmem:[%s1 + $0x208] sm:$0xff]
    %v89 = vld [vmem:[%s1 + $0x210] sm:$0xff]
    %v90 = vld [vmem:[%s1 + $0x218] sm:$0xff]
    %v91 = vld [vmem:[%s1 + $0x220] sm:$0xff]
    %v92 = vld [vmem:[%s1 + $0x228] sm:$0xff]
    %v93 = vld [vmem:[%s1 + $0x230] sm:$0xff]
    %v94 = vld [vmem:[%s1 + $0x238] sm:$0xff]
    %v95 = vld [vmem:[%s1 + $0x240] sm:$0xff]
    %v96 = vld [vmem:[%s1 + $0x248] sm:$0xff]
    %v97 = vld [vmem:[%s1 + $0x250] sm:$0xff]
    %v98 = vld [vmem:[%s1 + $0x258] sm:$0xff]
    %v99 = vld [vmem:[%s1 + $0x260] sm:$0xff]
    %v100 = vld [vmem:[%s1 + $0x268] sm:$0xff]
    %v101 = vld [vmem:[%s1 + $0x270] sm:$0xff]
    %v102 = vld [vmem:[%s1 + $0x278] sm:$0xff]
    %v103 = vld [vmem:[%s1 + $0x280] sm:$0xff]
    %v104 = vld [vmem:[%s1 + $0x288] sm:$0xff]
    %v105 = vld [vmem:[%s1 + $0x290] sm:$0xff]
    %v106 = vld [vmem:[%s1 + $0x298] sm:$0xff]
    %v107 = vld [vmem:[%s1 + $0x2a0] sm:$0xff]
    %v108 = vld [vmem:[%s1 + $0x2a8] sm:$0xff]
    %v109 = vld [vmem:[%s1 + $0x2b0] sm:$0xff]
    %v110 = vld [vmem:[%s1 + $0x2b8] sm:$0xff]
    %v111 = vld [vmem:[%s1 + $0x2c0] sm:$0xff]
    %v112 = vld [vmem:[%s1 + $0x2c8] sm:$0xff]
    %v113 = vld [vmem:[%s1 + $0x2d0] sm:$0xff]
    %v114 = vld [vmem:[%s1 + $0x2d8] sm:$0xff]
    %v115 = vld [vmem:[%s1 + $0x2e0] sm:$0xff]
    %v116 = vld [vmem:[%s1 + $0x2e8] sm:$0xff]
    %v117 = vld [vmem:[%s1 + $0x2f0] sm:$0xff]
    %v118 = vld [vmem:[%s1 + $0x2f8] sm:$0xff]
    %v119 = vld [vmem:[%s1 + $0x300] sm:$0xff]
    %v120 = vld [vmem:[%s1 + $0x308] sm:$0xff]
    %v121 = vld [vmem:[%s1 + $0x310] sm:$0xff]
    %v122 = vld [vmem:[%s1 + $0x318] sm:$0xff]
    %v123 = vld [vmem:[%s1 + $0x320] sm:$0xff]
    %v124 = vld [vmem:[%s1 + $0x328] sm:$0xff]
    %v125 = vld [vmem:[%s1 + $0x330] sm:$0xff]
    %v126 = vld [vmem:[%s1 + $0x338] sm:$0xff]
    %v127 = vld [vmem:[%s1 + $0x340] sm:$0xff]
    %v128 = vld [vmem:[%s1 + $0x348] sm:$0xff]
    %v129 = vld [vmem:[%s1 + $0x350] sm:$0xff]
    %v130 = vld [vmem:[%s1 + $0x358] sm:$0xff]
    %v131 = vld [vmem:[%s1 + $0x360] sm:$0xff]
    %v132 = vld [vmem:[%s1 + $0x368] sm:$0xff]
    %v133 = vld [vmem:[%s1 + $0x370] sm:$0xff]
    %v134 = vld [vmem:[%s1 + $0x378] sm:$0xff]
    %v135 = vld [vmem:[%s1 + $0x380] sm:$0xff]
    %v136 = vld [vmem:[%s1 + $0x388] sm:$0xff]
    %v137 = vld [vmem:[%s1 + $0x390] sm:$0xff]
    %v138 = vld [vmem:[%s1 + $0x398] sm:$0xff]
    %v139 = vld [vmem:[%s1 + $0x3a0] sm:$0xff]
    %v140 = vld [vmem:[%s1 + $0x3a8] sm:$0xff]
    %v141 = vld [vmem:[%s1 + $0x3b0] sm:$0xff]
    %v142 = vld [vmem:[%s1 + $0x3b8] sm:$0xff]
    %v143 = vld [vmem:[%s1 + $0x3c0] sm:$0xff]
    %v144 = vld [vmem:[%s1 + $0x3c8] sm:$0xff]
    %v145 = vld [vmem:[%s1 + $0x3d0] sm:$0xff]
    %v146 = vld [vmem:[%s1 + $0x3d8] sm:$0xff]
    %v147 = vld [vmem:[%s1 + $0x3e0] sm:$0xff]
    %v148 = vld [vmem:[%s1 + $0x3e8] sm:$0xff]
    %v149 = vld [vmem:[%s1 + $0x3f0] sm:$0xff]
    %v150 = vld [vmem:[%s1 + $0x3f8] sm:$0xff]
    %v151 = vld [vmem:[%s2] sm:$0xff]
    %v153 = vlaneseq
    %v154 = vshrl.u32 %v153, 7
    %v155 = vsub.s32 0, %v154
    %v156 = vrot.slane %v151, %v155
    %v157 = vlaneseq
    %v158 = vshrl.u32 %v157, 7
    %v159 = vsub.s32 1, %v158
    %v160 = vrot.slane %v151, %v159
    %v161 = vlaneseq
    %v162 = vshrl.u32 %v161, 7
    %v163 = vsub.s32 2, %v162
    %v164 = vrot.slane %v151, %v163
    %v165 = vlaneseq
    %v166 = vshrl.u32 %v165, 7
    %v167 = vsub.s32 3, %v166
    %v168 = vrot.slane %v151, %v167
    %v169 = vlaneseq
    %v170 = vshrl.u32 %v169, 7
    %v171 = vsub.s32 4, %v170
    %v172 = vrot.slane %v151, %v171
    %v173 = vlaneseq
    %v174 = vshrl.u32 %v173, 7
    %v175 = vsub.s32 5, %v174
    %v176 = vrot.slane %v151, %v175
    %v177 = vlaneseq
    %v178 = vshrl.u32 %v177, 7
    %v179 = vsub.s32 6, %v178
    %v180 = vrot.slane %v151, %v179
    %v181 = vlaneseq
    %v182 = vshrl.u32 %v181, 7
    %v183 = vsub.s32 7, %v182
    %v184 = vrot.slane %v151, %v183
    %193 = vmatprep.subr.mxu0 %v24
    %194 = vmatpush1.msra.mxu0 %v23
    %195 = vmatprep.subr.mxu0 %v32
    %196 = vmatpush1.msra.mxu0 %v31
    %197 = vmatprep.subr.mxu0 %v40
    %198 = vmatpush1.msra.mxu0 %v39
    %199 = vmatprep.subr.mxu0 %v48
    %200 = vmatpush1.msra.mxu0 %v47
    %201 = vmatprep.subr.mxu0 %v56
    %202 = vmatpush1.msra.mxu0 %v55
    %203 = vmatprep.subr.mxu0 %v64
    %204 = vmatpush1.msra.mxu0 %v63
    %205 = vmatprep.subr.mxu0 %v72
    %206 = vmatpush1.msra.mxu0 %v71
    %207 = vmatprep.subr.mxu0 %v80
    %208 = vmatpush1.msra.mxu0 %v79
    %209 = vmatprep.subr.mxu0 %v88
    %210 = vmatpush1.msra.mxu0 %v87
    %211 = vmatprep.subr.mxu0 %v96
    %212 = vmatpush1.msra.mxu0 %v95
    %213 = vmatprep.subr.mxu0 %v104
    %214 = vmatpush1.msra.mxu0 %v103
    %215 = vmatprep.subr.mxu0 %v112
    %216 = vmatpush1.msra.mxu0 %v111
    %217 = vmatprep.subr.mxu0 %v120
    %218 = vmatpush1.msra.mxu0 %v119
    %219 = vmatprep.subr.mxu0 %v128
    %220 = vmatpush1.msra.mxu0 %v127
    %221 = vmatprep.subr.mxu0 %v136
    %222 = vmatpush1.msra.mxu0 %v135
    %223 = vmatprep.subr.mxu0 %v144
    %224 = vmatpush1.msra.mxu0 %v143
    %225 = vmatprep.subr.mxu0 0.0
    %226 = vmatpush1.msra.mxu0 0.0
    %227 = vmatprep.subr.mxu0 0.0
    %228 = vmatpush1.msra.mxu0 0.0
    %229 = vmatprep.subr.mxu0 0.0
    %230 = vmatpush1.msra.mxu0 0.0
    %231 = vmatprep.subr.mxu0 0.0
    %232 = vmatpush1.msra.mxu0 0.0
    %233 = vmatprep.subr.mxu0 0.0
    %234 = vmatpush1.msra.mxu0 0.0
    %235 = vmatprep.subr.mxu0 0.0
    %236 = vmatpush1.msra.mxu0 0.0
    %237 = vmatprep.subr.mxu0 0.0
    %238 = vmatpush1.msra.mxu0 0.0
    %239 = vmatprep.subr.mxu0 0.0
    %240 = vmatpush1.msra.mxu0 0.0
    %241 = vmatprep.subr.mxu0 0.0
    %242 = vmatpush1.msra.mxu0 0.0
    %243 = vmatprep.subr.mxu0 0.0
    %244 = vmatpush1.msra.mxu0 0.0
    %245 = vmatprep.subr.mxu0 0.0
    %246 = vmatpush1.msra.mxu0 0.0
    %247 = vmatprep.subr.mxu0 0.0
    %248 = vmatpush1.msra.mxu0 0.0
    %249 = vmatprep.subr.mxu0 0.0
    %250 = vmatpush1.msra.mxu0 0.0
    %251 = vmatprep.subr.mxu0 0.0
    %252 = vmatpush1.msra.mxu0 0.0
    %253 = vmatprep.subr.mxu0 0.0
    %254 = vmatpush1.msra.mxu0 0.0
    %255 = vmatprep.subr.mxu0 0.0
    %256 = vmatpush1.msra.mxu0 0.0
    %257 = vmatprep.mubr.f32.mxu0 0.0
    %258 = vmatmul.mubr.f32.gmra.mrb[0].mxu0 %v22
    %v259 = vpop.f32.mrb[0].mxu0
    %v260 = vadd.f32 %v156, %v259
    %v261 = vpop.f32.mrb[0].mxu0
    %v262 = vadd.f32 %v160, %v261
    %263 = vdwg.mxu0
    %264 = vmatprep.subr.mxu0 %v26
    %265 = vmatpush1.msra.mxu0 %v25
    %266 = vmatprep.subr.mxu0 %v34
    %267 = vmatpush1.msra.mxu0 %v33
    %268 = vmatprep.subr.mxu0 %v42
    %269 = vmatpush1.msra.mxu0 %v41
    %270 = vmatprep.subr.mxu0 %v50
    %271 = vmatpush1.msra.mxu0 %v49
    %272 = vmatprep.subr.mxu0 %v58
    %273 = vmatpush1.msra.mxu0 %v57
    %274 = vmatprep.subr.mxu0 %v66
    %275 = vmatpush1.msra.mxu0 %v65
    %276 = vmatprep.subr.mxu0 %v74
    %277 = vmatpush1.msra.mxu0 %v73
    %278 = vmatprep.subr.mxu0 %v82
    %279 = vmatpush1.msra.mxu0 %v81
    %280 = vmatprep.subr.mxu0 %v90
    %281 = vmatpush1.msra.mxu0 %v89
    %282 = vmatprep.subr.mxu0 %v98
    %283 = vmatpush1.msra.mxu0 %v97
    %284 = vmatprep.subr.mxu0 %v106
    %285 = vmatpush1.msra.mxu0 %v105
    %286 = vmatprep.subr.mxu0 %v114
    %287 = vmatpush1.msra.mxu0 %v113
    %288 = vmatprep.subr.mxu0 %v122
    %289 = vmatpush1.msra.mxu0 %v121
    %290 = vmatprep.subr.mxu0 %v130
    %291 = vmatpush1.msra.mxu0 %v129
    %292 = vmatprep.subr.mxu0 %v138
    %293 = vmatpush1.msra.mxu0 %v137
    %294 = vmatprep.subr.mxu0 %v146
    %295 = vmatpush1.msra.mxu0 %v145
    %296 = vmatprep.subr.mxu0 0.0
    %297 = vmatpush1.msra.mxu0 0.0
    %298 = vmatprep.subr.mxu0 0.0
    %299 = vmatpush1.msra.mxu0 0.0
    %300 = vmatprep.subr.mxu0 0.0
    %301 = vmatpush1.msra.mxu0 0.0
    %302 = vmatprep.subr.mxu0 0.0
    %303 = vmatpush1.msra.mxu0 0.0
    %304 = vmatprep.subr.mxu0 0.0
    %305 = vmatpush1.msra.mxu0 0.0
    %306 = vmatprep.subr.mxu0 0.0
    %307 = vmatpush1.msra.mxu0 0.0
    %308 = vmatprep.subr.mxu0 0.0
    %309 = vmatpush1.msra.mxu0 0.0
    %310 = vmatprep.subr.mxu0 0.0
    %311 = vmatpush1.msra.mxu0 0.0
    %312 = vmatprep.subr.mxu0 0.0
    %313 = vmatpush1.msra.mxu0 0.0
    %314 = vmatprep.subr.mxu0 0.0
    %315 = vmatpush1.msra.mxu0 0.0
    %316 = vmatprep.subr.mxu0 0.0
    %317 = vmatpush1.msra.mxu0 0.0
    %318 = vmatprep.subr.mxu0 0.0
    %319 = vmatpush1.msra.mxu0 0.0
    %320 = vmatprep.subr.mxu0 0.0
    %321 = vmatpush1.msra.mxu0 0.0
    %322 = vmatprep.subr.mxu0 0.0
    %323 = vmatpush1.msra.mxu0 0.0
    %324 = vmatprep.subr.mxu0 0.0
    %325 = vmatpush1.msra.mxu0 0.0
    %326 = vmatprep.subr.mxu0 0.0
    %327 = vmatpush1.msra.mxu0 0.0
    %328 = vmatprep.mubr.f32.mxu0 0.0
    %329 = vmatmul.mubr.f32.gmra.mrb[0].mxu0 %v22
    %v330 = vpop.f32.mrb[0].mxu0
    %v331 = vadd.f32 %v164, %v330
    %v332 = vpop.f32.mrb[0].mxu0
    %v333 = vadd.f32 %v168, %v332
    %334 = vdwg.mxu0
    %335 = vmatprep.subr.mxu0 %v28
    %336 = vmatpush1.msra.mxu0 %v27
    %337 = vmatprep.subr.mxu0 %v36
    %338 = vmatpush1.msra.mxu0 %v35
    %339 = vmatprep.subr.mxu0 %v44
    %340 = vmatpush1.msra.mxu0 %v43
    %341 = vmatprep.subr.mxu0 %v52
    %342 = vmatpush1.msra.mxu0 %v51
    %343 = vmatprep.subr.mxu0 %v60
    %344 = vmatpush1.msra.mxu0 %v59
    %345 = vmatprep.subr.mxu0 %v68
    %346 = vmatpush1.msra.mxu0 %v67
    %347 = vmatprep.subr.mxu0 %v76
    %348 = vmatpush1.msra.mxu0 %v75
    %349 = vmatprep.subr.mxu0 %v84
    %350 = vmatpush1.msra.mxu0 %v83
    %351 = vmatprep.subr.mxu0 %v92
    %352 = vmatpush1.msra.mxu0 %v91
    %353 = vmatprep.subr.mxu0 %v100
    %354 = vmatpush1.msra.mxu0 %v99
    %355 = vmatprep.subr.mxu0 %v108
    %356 = vmatpush1.msra.mxu0 %v107
    %357 = vmatprep.subr.mxu0 %v116
    %358 = vmatpush1.msra.mxu0 %v115
    %359 = vmatprep.subr.mxu0 %v124
    %360 = vmatpush1.msra.mxu0 %v123
    %361 = vmatprep.subr.mxu0 %v132
    %362 = vmatpush1.msra.mxu0 %v131
    %363 = vmatprep.subr.mxu0 %v140
    %364 = vmatpush1.msra.mxu0 %v139
    %365 = vmatprep.subr.mxu0 %v148
    %366 = vmatpush1.msra.mxu0 %v147
    %367 = vmatprep.subr.mxu0 0.0
    %368 = vmatpush1.msra.mxu0 0.0
    %369 = vmatprep.subr.mxu0 0.0
    %370 = vmatpush1.msra.mxu0 0.0
    %371 = vmatprep.subr.mxu0 0.0
    %372 = vmatpush1.msra.mxu0 0.0
    %373 = vmatprep.subr.mxu0 0.0
    %374 = vmatpush1.msra.mxu0 0.0
    %375 = vmatprep.subr.mxu0 0.0
    %376 = vmatpush1.msra.mxu0 0.0
    %377 = vmatprep.subr.mxu0 0.0
    %378 = vmatpush1.msra.mxu0 0.0
    %379 = vmatprep.subr.mxu0 0.0
    %380 = vmatpush1.msra.mxu0 0.0
    %381 = vmatprep.subr.mxu0 0.0
    %382 = vmatpush1.msra.mxu0 0.0
    %383 = vmatprep.subr.mxu0 0.0
    %384 = vmatpush1.msra.mxu0 0.0
    %385 = vmatprep.subr.mxu0 0.0
    %386 = vmatpush1.msra.mxu0 0.0
    %387 = vmatprep.subr.mxu0 0.0
    %388 = vmatpush1.msra.mxu0 0.0
    %389 = vmatprep.subr.mxu0 0.0
    %390 = vmatpush1.msra.mxu0 0.0
    %391 = vmatprep.subr.mxu0 0.0
    %392 = vmatpush1.msra.mxu0 0.0
    %393 = vmatprep.subr.mxu0 0.0
    %394 = vmatpush1.msra.mxu0 0.0
    %395 = vmatprep.subr.mxu0 0.0
    %396 = vmatpush1.msra.mxu0 0.0
    %397 = vmatprep.subr.mxu0 0.0
    %398 = vmatpush1.msra.mxu0 0.0
    %399 = vmatprep.mubr.f32.mxu0 0.0
    %400 = vmatmul.mubr.f32.gmra.mrb[0].mxu0 %v22
    %v401 = vpop.f32.mrb[0].mxu0
    %v402 = vadd.f32 %v172, %v401
    %v403 = vpop.f32.mrb[0].mxu0
    %v404 = vadd.f32 %v176, %v403
    %405 = vdwg.mxu0
    %406 = vmatprep.subr.mxu0 %v30
    %407 = vmatpush1.msra.mxu0 %v29
    %408 = vmatprep.subr.mxu0 %v38
    %409 = vmatpush1.msra.mxu0 %v37
    %410 = vmatprep.subr.mxu0 %v46
    %411 = vmatpush1.msra.mxu0 %v45
    %412 = vmatprep.subr.mxu0 %v54
    %413 = vmatpush1.msra.mxu0 %v53
    %414 = vmatprep.subr.mxu0 %v62
    %415 = vmatpush1.msra.mxu0 %v61
    %416 = vmatprep.subr.mxu0 %v70
    %417 = vmatpush1.msra.mxu0 %v69
    %418 = vmatprep.subr.mxu0 %v78
    %419 = vmatpush1.msra.mxu0 %v77
    %420 = vmatprep.subr.mxu0 %v86
    %421 = vmatpush1.msra.mxu0 %v85
    %422 = vmatprep.subr.mxu0 %v94
    %423 = vmatpush1.msra.mxu0 %v93
    %424 = vmatprep.subr.mxu0 %v102
    %425 = vmatpush1.msra.mxu0 %v101
    %426 = vmatprep.subr.mxu0 %v110
    %427 = vmatpush1.msra.mxu0 %v109
    %428 = vmatprep.subr.mxu0 %v118
    %429 = vmatpush1.msra.mxu0 %v117
    %430 = vmatprep.subr.mxu0 %v126
    %431 = vmatpush1.msra.mxu0 %v125
    %432 = vmatprep.subr.mxu0 %v134
    %433 = vmatpush1.msra.mxu0 %v133
    %434 = vmatprep.subr.mxu0 %v142
    %435 = vmatpush1.msra.mxu0 %v141
    %436 = vmatprep.subr.mxu0 %v150
    %437 = vmatpush1.msra.mxu0 %v149
    %438 = vmatprep.subr.mxu0 0.0
    %439 = vmatpush1.msra.mxu0 0.0
    %440 = vmatprep.subr.mxu0 0.0
    %441 = vmatpush1.msra.mxu0 0.0
    %442 = vmatprep.subr.mxu0 0.0
    %443 = vmatpush1.msra.mxu0 0.0
    %444 = vmatprep.subr.mxu0 0.0
    %445 = vmatpush1.msra.mxu0 0.0
    %446 = vmatprep.subr.mxu0 0.0
    %447 = vmatpush1.msra.mxu0 0.0
    %448 = vmatprep.subr.mxu0 0.0
    %449 = vmatpush1.msra.mxu0 0.0
    %450 = vmatprep.subr.mxu0 0.0
    %451 = vmatpush1.msra.mxu0 0.0
    %452 = vmatprep.subr.mxu0 0.0
    %453 = vmatpush1.msra.mxu0 0.0
    %454 = vmatprep.subr.mxu0 0.0
    %455 = vmatpush1.msra.mxu0 0.0
    %456 = vmatprep.subr.mxu0 0.0
    %457 = vmatpush1.msra.mxu0 0.0
    %458 = vmatprep.subr.mxu0 0.0
    %459 = vmatpush1.msra.mxu0 0.0
    %460 = vmatprep.subr.mxu0 0.0
    %461 = vmatpush1.msra.mxu0 0.0
    %462 = vmatprep.subr.mxu0 0.0
    %463 = vmatpush1.msra.mxu0 0.0
    %464 = vmatprep.subr.mxu0 0.0
    %465 = vmatpush1.msra.mxu0 0.0
    %466 = vmatprep.subr.mxu0 0.0
    %467 = vmatpush1.msra.mxu0 0.0
    %468 = vmatprep.subr.mxu0 0.0
    %469 = vmatpush1.msra.mxu0 0.0
    %470 = vmatprep.mubr.f32.mxu0 0.0
    %471 = vmatmul.mubr.f32.gmra.mrb[0].mxu0 %v22
    %v472 = vpop.f32.mrb[0].mxu0
    %v473 = vadd.f32 %v180, %v472
    %v474 = vpop.f32.mrb[0].mxu0
    %v475 = vadd.f32 %v184, %v474
    %476 = vdwg.mxu0
    %v477 = vmax.f32 %v260, 0.0
    %v478 = vmax.f32 %v262, 0.0
    %v479 = vmax.f32 %v331, 0.0
    %v480 = vmax.f32 %v333, 0.0
    %v481 = vmax.f32 %v402, 0.0
    %v482 = vmax.f32 %v404, 0.0
    %v483 = vmax.f32 %v473, 0.0
    %v484 = vmax.f32 %v475, 0.0
    %v485 = vld [vmem:[%s3] sm:$0xff]
    %v486 = vld [vmem:[%s3 + $0x8] sm:$0xff]
    %v487 = vld [vmem:[%s3 + $0x10] sm:$0xff]
    %v488 = vld [vmem:[%s3 + $0x18] sm:$0xff]
    %v489 = vld [vmem:[%s3 + $0x20] sm:$0xff]
    %v490 = vld [vmem:[%s3 + $0x28] sm:$0xff]
    %v491 = vld [vmem:[%s3 + $0x30] sm:$0xff]
    %v492 = vld [vmem:[%s3 + $0x38] sm:$0xff]
    %v493 = vld [vmem:[%s3 + $0x40] sm:$0xff]
    %v494 = vld [vmem:[%s3 + $0x48] sm:$0xff]
    %v495 = vld [vmem:[%s3 + $0x50] sm:$0xff]
    %v496 = vld [vmem:[%s3 + $0x58] sm:$0xff]
    %v497 = vld [vmem:[%s3 + $0x60] sm:$0xff]
    %v498 = vld [vmem:[%s3 + $0x68] sm:$0xff]
    %v499 = vld [vmem:[%s3 + $0x70] sm:$0xff]
    %v500 = vld [vmem:[%s3 + $0x78] sm:$0xff]
    %v501 = vld [vmem:[%s3 + $0x80] sm:$0xff]
    %v502 = vld [vmem:[%s3 + $0x88] sm:$0xff]
    %v503 = vld [vmem:[%s3 + $0x90] sm:$0xff]
    %v504 = vld [vmem:[%s3 + $0x98] sm:$0xff]
    %v505 = vld [vmem:[%s3 + $0xa0] sm:$0xff]
    %v506 = vld [vmem:[%s3 + $0xa8] sm:$0xff]
    %v507 = vld [vmem:[%s3 + $0xb0] sm:$0xff]
    %v508 = vld [vmem:[%s3 + $0xb8] sm:$0xff]
    %v509 = vld [vmem:[%s3 + $0xc0] sm:$0xff]
    %v510 = vld [vmem:[%s3 + $0xc8] sm:$0xff]
    %v511 = vld [vmem:[%s3 + $0xd0] sm:$0xff]
    %v512 = vld [vmem:[%s3 + $0xd8] sm:$0xff]
    %v513 = vld [vmem:[%s3 + $0xe0] sm:$0xff]
    %v514 = vld [vmem:[%s3 + $0xe8] sm:$0xff]
    %v515 = vld [vmem:[%s3 + $0xf0] sm:$0xff]
    %v516 = vld [vmem:[%s3 + $0xf8] sm:$0xff]
    %v517 = vld [vmem:[%s3 + $0x100] sm:$0xff]
    %v518 = vld [vmem:[%s3 + $0x108] sm:$0xff]
    %v519 = vld [vmem:[%s3 + $0x110] sm:$0xff]
    %v520 = vld [vmem:[%s3 + $0x118] sm:$0xff]
    %v521 = vld [vmem:[%s3 + $0x120] sm:$0xff]
    %v522 = vld [vmem:[%s3 + $0x128] sm:$0xff]
    %v523 = vld [vmem:[%s3 + $0x130] sm:$0xff]
    %v524 = vld [vmem:[%s3 + $0x138] sm:$0xff]
    %v525 = vld [vmem:[%s3 + $0x140] sm:$0xff]
    %v526 = vld [vmem:[%s3 + $0x148] sm:$0xff]
    %v527 = vld [vmem:[%s3 + $0x150] sm:$0xff]
    %v528 = vld [vmem:[%s3 + $0x158] sm:$0xff]
    %v529 = vld [vmem:[%s3 + $0x160] sm:$0xff]
    %v530 = vld [vmem:[%s3 + $0x168] sm:$0xff]
    %v531 = vld [vmem:[%s3 + $0x170] sm:$0xff]
    %v532 = vld [vmem:[%s3 + $0x178] sm:$0xff]
    %v533 = vld [vmem:[%s3 + $0x180] sm:$0xff]
    %v534 = vld [vmem:[%s3 + $0x188] sm:$0xff]
    %v535 = vld [vmem:[%s3 + $0x190] sm:$0xff]
    %v536 = vld [vmem:[%s3 + $0x198] sm:$0xff]
    %v537 = vld [vmem:[%s3 + $0x1a0] sm:$0xff]
    %v538 = vld [vmem:[%s3 + $0x1a8] sm:$0xff]
    %v539 = vld [vmem:[%s3 + $0x1b0] sm:$0xff]
    %v540 = vld [vmem:[%s3 + $0x1b8] sm:$0xff]
    %v541 = vld [vmem:[%s3 + $0x1c0] sm:$0xff]
    %v542 = vld [vmem:[%s3 + $0x1c8] sm:$0xff]
    %v543 = vld [vmem:[%s3 + $0x1d0] sm:$0xff]
    %v544 = vld [vmem:[%s3 + $0x1d8] sm:$0xff]
    %v545 = vld [vmem:[%s3 + $0x1e0] sm:$0xff]
    %v546 = vld [vmem:[%s3 + $0x1e8] sm:$0xff]
    %v547 = vld [vmem:[%s3 + $0x1f0] sm:$0xff]
    %v548 = vld [vmem:[%s3 + $0x1f8] sm:$0xff]
    %v549 = vld [vmem:[%s3 + $0x200] sm:$0xff]
    %v550 = vld [vmem:[%s3 + $0x208] sm:$0xff]
    %v551 = vld [vmem:[%s3 + $0x210] sm:$0xff]
    %v552 = vld [vmem:[%s3 + $0x218] sm:$0xff]
    %v553 = vld [vmem:[%s3 + $0x220] sm:$0xff]
    %v554 = vld [vmem:[%s3 + $0x228] sm:$0xff]
    %v555 = vld [vmem:[%s3 + $0x230] sm:$0xff]
    %v556 = vld [vmem:[%s3 + $0x238] sm:$0xff]
    %v557 = vld [vmem:[%s3 + $0x240] sm:$0xff]
    %v558 = vld [vmem:[%s3 + $0x248] sm:$0xff]
    %v559 = vld [vmem:[%s3 + $0x250] sm:$0xff]
    %v560 = vld [vmem:[%s3 + $0x258] sm:$0xff]
    %v561 = vld [vmem:[%s3 + $0x260] sm:$0xff]
    %v562 = vld [vmem:[%s3 + $0x268] sm:$0xff]
    %v563 = vld [vmem:[%s3 + $0x270] sm:$0xff]
    %v564 = vld [vmem:[%s3 + $0x278] sm:$0xff]
    %v565 = vld [vmem:[%s3 + $0x280] sm:$0xff]
    %v566 = vld [vmem:[%s3 + $0x288] sm:$0xff]
    %v567 = vld [vmem:[%s3 + $0x290] sm:$0xff]
    %v568 = vld [vmem:[%s3 + $0x298] sm:$0xff]
    %v569 = vld [vmem:[%s3 + $0x2a0] sm:$0xff]
    %v570 = vld [vmem:[%s3 + $0x2a8] sm:$0xff]
    %v571 = vld [vmem:[%s3 + $0x2b0] sm:$0xff]
    %v572 = vld [vmem:[%s3 + $0x2b8] sm:$0xff]
    %v573 = vld [vmem:[%s3 + $0x2c0] sm:$0xff]
    %v574 = vld [vmem:[%s3 + $0x2c8] sm:$0xff]
    %v575 = vld [vmem:[%s3 + $0x2d0] sm:$0xff]
    %v576 = vld [vmem:[%s3 + $0x2d8] sm:$0xff]
    %v577 = vld [vmem:[%s3 + $0x2e0] sm:$0xff]
    %v578 = vld [vmem:[%s3 + $0x2e8] sm:$0xff]
    %v579 = vld [vmem:[%s3 + $0x2f0] sm:$0xff]
    %v580 = vld [vmem:[%s3 + $0x2f8] sm:$0xff]
    %v581 = vld [vmem:[%s3 + $0x300] sm:$0xff]
    %v582 = vld [vmem:[%s3 + $0x308] sm:$0xff]
    %v583 = vld [vmem:[%s3 + $0x310] sm:$0xff]
    %v584 = vld [vmem:[%s3 + $0x318] sm:$0xff]
    %v585 = vld [vmem:[%s3 + $0x320] sm:$0xff]
    %v586 = vld [vmem:[%s3 + $0x328] sm:$0xff]
    %v587 = vld [vmem:[%s3 + $0x330] sm:$0xff]
    %v588 = vld [vmem:[%s3 + $0x338] sm:$0xff]
    %v589 = vld [vmem:[%s3 + $0x340] sm:$0xff]
    %v590 = vld [vmem:[%s3 + $0x348] sm:$0xff]
    %v591 = vld [vmem:[%s3 + $0x350] sm:$0xff]
    %v592 = vld [vmem:[%s3 + $0x358] sm:$0xff]
    %v593 = vld [vmem:[%s3 + $0x360] sm:$0xff]
    %v594 = vld [vmem:[%s3 + $0x368] sm:$0xff]
    %v595 = vld [vmem:[%s3 + $0x370] sm:$0xff]
    %v596 = vld [vmem:[%s3 + $0x378] sm:$0xff]
    %v597 = vld [vmem:[%s3 + $0x380] sm:$0xff]
    %v598 = vld [vmem:[%s3 + $0x388] sm:$0xff]
    %v599 = vld [vmem:[%s3 + $0x390] sm:$0xff]
    %v600 = vld [vmem:[%s3 + $0x398] sm:$0xff]
    %v601 = vld [vmem:[%s3 + $0x3a0] sm:$0xff]
    %v602 = vld [vmem:[%s3 + $0x3a8] sm:$0xff]
    %v603 = vld [vmem:[%s3 + $0x3b0] sm:$0xff]
    %v604 = vld [vmem:[%s3 + $0x3b8] sm:$0xff]
    %v605 = vld [vmem:[%s3 + $0x3c0] sm:$0xff]
    %v606 = vld [vmem:[%s3 + $0x3c8] sm:$0xff]
    %v607 = vld [vmem:[%s3 + $0x3d0] sm:$0xff]
    %v608 = vld [vmem:[%s3 + $0x3d8] sm:$0xff]
    %v609 = vld [vmem:[%s3 + $0x3e0] sm:$0xff]
    %v610 = vld [vmem:[%s3 + $0x3e8] sm:$0xff]
    %v611 = vld [vmem:[%s3 + $0x3f0] sm:$0xff]
    %v612 = vld [vmem:[%s3 + $0x3f8] sm:$0xff]
    %s613 = sld [smem:[#allocation2]]
    %v614 = vstv %s613
    %615 = vmatprep.subr.mxu0 0.0
    %616 = vmatpush1.msra.mxu0 %v485
    %617 = vmatprep.subr.mxu0 0.0
    %618 = vmatpush1.msra.mxu0 %v486
    %619 = vmatprep.subr.mxu0 0.0
    %620 = vmatpush1.msra.mxu0 %v487
    %621 = vmatprep.subr.mxu0 0.0
    %622 = vmatpush1.msra.mxu0 %v488
    %623 = vmatprep.subr.mxu0 0.0
    %624 = vmatpush1.msra.mxu0 %v489
    %625 = vmatprep.subr.mxu0 0.0
    %626 = vmatpush1.msra.mxu0 %v490
    %627 = vmatprep.subr.mxu0 0.0
    %628 = vmatpush1.msra.mxu0 %v491
    %629 = vmatprep.subr.mxu0 0.0
    %630 = vmatpush1.msra.mxu0 %v492
    %631 = vmatprep.subr.mxu0 0.0
    %632 = vmatpush1.msra.mxu0 %v493
    %633 = vmatprep.subr.mxu0 0.0
    %634 = vmatpush1.msra.mxu0 %v494
    %635 = vmatprep.subr.mxu0 0.0
    %636 = vmatpush1.msra.mxu0 %v495
    %637 = vmatprep.subr.mxu0 0.0
    %638 = vmatpush1.msra.mxu0 %v496
    %639 = vmatprep.subr.mxu0 0.0
    %640 = vmatpush1.msra.mxu0 %v497
    %641 = vmatprep.subr.mxu0 0.0
    %642 = vmatpush1.msra.mxu0 %v498
    %643 = vmatprep.subr.mxu0 0.0
    %644 = vmatpush1.msra.mxu0 %v499
    %645 = vmatprep.subr.mxu0 0.0
    %646 = vmatpush1.msra.mxu0 %v500
    %647 = vmatprep.subr.mxu0 0.0
    %648 = vmatpush1.msra.mxu0 %v501
    %649 = vmatprep.subr.mxu0 0.0
    %650 = vmatpush1.msra.mxu0 %v502
    %651 = vmatprep.subr.mxu0 0.0
    %652 = vmatpush1.msra.mxu0 %v503
    %653 = vmatprep.subr.mxu0 0.0
    %654 = vmatpush1.msra.mxu0 %v504
    %655 = vmatprep.subr.mxu0 0.0
    %656 = vmatpush1.msra.mxu0 %v505
    %657 = vmatprep.subr.mxu0 0.0
    %658 = vmatpush1.msra.mxu0 %v506
    %659 = vmatprep.subr.mxu0 0.0
    %660 = vmatpush1.msra.mxu0 %v507
    %661 = vmatprep.subr.mxu0 0.0
    %662 = vmatpush1.msra.mxu0 %v508
    %663 = vmatprep.subr.mxu0 0.0
    %664 = vmatpush1.msra.mxu0 %v509
    %665 = vmatprep.subr.mxu0 0.0
    %666 = vmatpush1.msra.mxu0 %v510
    %667 = vmatprep.subr.mxu0 0.0
    %668 = vmatpush1.msra.mxu0 %v511
    %669 = vmatprep.subr.mxu0 0.0
    %670 = vmatpush1.msra.mxu0 %v512
    %671 = vmatprep.subr.mxu0 0.0
    %672 = vmatpush1.msra.mxu0 %v513
    %673 = vmatprep.subr.mxu0 0.0
    %674 = vmatpush1.msra.mxu0 %v514
    %675 = vmatprep.subr.mxu0 0.0
    %676 = vmatpush1.msra.mxu0 %v515
    %677 = vmatprep.subr.mxu0 0.0
    %678 = vmatpush1.msra.mxu0 %v516
    %679 = vmatprep.mubr.f32.mxu0 %v478
    %680 = vmatmul.mubr.f32.gmra.mrb[0].mxu0 %v477
    %v681 = vpop.f32.mrb[0].mxu0
    %v682 = vadd.f32 %v614, %v681
    %v683 = vpop.f32.mrb[0].mxu0
    %684 = vdwg.mxu0
    %685 = vmatprep.subr.mxu0 0.0
    %686 = vmatpush1.msra.mxu0 %v517
    %687 = vmatprep.subr.mxu0 0.0
    %688 = vmatpush1.msra.mxu0 %v518
    %689 = vmatprep.subr.mxu0 0.0
    %690 = vmatpush1.msra.mxu0 %v519
    %691 = vmatprep.subr.mxu0 0.0
    %692 = vmatpush1.msra.mxu0 %v520
    %693 = vmatprep.subr.mxu0 0.0
    %694 = vmatpush1.msra.mxu0 %v521
    %695 = vmatprep.subr.mxu0 0.0
    %696 = vmatpush1.msra.mxu0 %v522
    %697 = vmatprep.subr.mxu0 0.0
    %698 = vmatpush1.msra.mxu0 %v523
    %699 = vmatprep.subr.mxu0 0.0
    %700 = vmatpush1.msra.mxu0 %v524
    %701 = vmatprep.subr.mxu0 0.0
    %702 = vmatpush1.msra.mxu0 %v525
    %703 = vmatprep.subr.mxu0 0.0
    %704 = vmatpush1.msra.mxu0 %v526
    %705 = vmatprep.subr.mxu0 0.0
    %706 = vmatpush1.msra.mxu0 %v527
    %707 = vmatprep.subr.mxu0 0.0
    %708 = vmatpush1.msra.mxu0 %v528
    %709 = vmatprep.subr.mxu0 0.0
    %710 = vmatpush1.msra.mxu0 %v529
    %711 = vmatprep.subr.mxu0 0.0
    %712 = vmatpush1.msra.mxu0 %v530
    %713 = vmatprep.subr.mxu0 0.0
    %714 = vmatpush1.msra.mxu0 %v531
    %715 = vmatprep.subr.mxu0 0.0
    %716 = vmatpush1.msra.mxu0 %v532
    %717 = vmatprep.subr.mxu0 0.0
    %718 = vmatpush1.msra.mxu0 %v533
    %719 = vmatprep.subr.mxu0 0.0
    %720 = vmatpush1.msra.mxu0 %v534
    %721 = vmatprep.subr.mxu0 0.0
    %722 = vmatpush1.msra.mxu0 %v535
    %723 = vmatprep.subr.mxu0 0.0
    %724 = vmatpush1.msra.mxu0 %v536
    %725 = vmatprep.subr.mxu0 0.0
    %726 = vmatpush1.msra.mxu0 %v537
    %727 = vmatprep.subr.mxu0 0.0
    %728 = vmatpush1.msra.mxu0 %v538
    %729 = vmatprep.subr.mxu0 0.0
    %730 = vmatpush1.msra.mxu0 %v539
    %731 = vmatprep.subr.mxu0 0.0
    %732 = vmatpush1.msra.mxu0 %v540
    %733 = vmatprep.subr.mxu0 0.0
    %734 = vmatpush1.msra.mxu0 %v541
    %735 = vmatprep.subr.mxu0 0.0
    %736 = vmatpush1.msra.mxu0 %v542
    %737 = vmatprep.subr.mxu0 0.0
    %738 = vmatpush1.msra.mxu0 %v543
    %739 = vmatprep.subr.mxu0 0.0
    %740 = vmatpush1.msra.mxu0 %v544
    %741 = vmatprep.subr.mxu0 0.0
    %742 = vmatpush1.msra.mxu0 %v545
    %743 = vmatprep.subr.mxu0 0.0
    %744 = vmatpush1.msra.mxu0 %v546
    %745 = vmatprep.subr.mxu0 0.0
    %746 = vmatpush1.msra.mxu0 %v547
    %747 = vmatprep.subr.mxu0 0.0
    %748 = vmatpush1.msra.mxu0 %v548
    %749 = vmatprep.mubr.f32.mxu0 %v480
    %750 = vmatmul.mubr.f32.gmra.mrb[0].mxu0 %v479
    %v751 = vpop.f32.mrb[0].mxu0
    %v752 = vadd.f32 %v682, %v751
    %v753 = vpop.f32.mrb[0].mxu0
    %754 = vdwg.mxu0
    %755 = vmatprep.subr.mxu0 0.0
    %756 = vmatpush1.msra.mxu0 %v549
    %757 = vmatprep.subr.mxu0 0.0
    %758 = vmatpush1.msra.mxu0 %v550
    %759 = vmatprep.subr.mxu0 0.0
    %760 = vmatpush1.msra.mxu0 %v551
    %761 = vmatprep.subr.mxu0 0.0
    %762 = vmatpush1.msra.mxu0 %v552
    %763 = vmatprep.subr.mxu0 0.0
    %764 = vmatpush1.msra.mxu0 %v553
    %765 = vmatprep.subr.mxu0 0.0
    %766 = vmatpush1.msra.mxu0 %v554
    %767 = vmatprep.subr.mxu0 0.0
    %768 = vmatpush1.msra.mxu0 %v555
    %769 = vmatprep.subr.mxu0 0.0
    %770 = vmatpush1.msra.mxu0 %v556
    %771 = vmatprep.subr.mxu0 0.0
    %772 = vmatpush1.msra.mxu0 %v557
    %773 = vmatprep.subr.mxu0 0.0
    %774 = vmatpush1.msra.mxu0 %v558
    %775 = vmatprep.subr.mxu0 0.0
    %776 = vmatpush1.msra.mxu0 %v559
    %777 = vmatprep.subr.mxu0 0.0
    %778 = vmatpush1.msra.mxu0 %v560
    %779 = vmatprep.subr.mxu0 0.0
    %780 = vmatpush1.msra.mxu0 %v561
    %781 = vmatprep.subr.mxu0 0.0
    %782 = vmatpush1.msra.mxu0 %v562
    %783 = vmatprep.subr.mxu0 0.0
    %784 = vmatpush1.msra.mxu0 %v563
    %785 = vmatprep.subr.mxu0 0.0
    %786 = vmatpush1.msra.mxu0 %v564
    %787 = vmatprep.subr.mxu0 0.0
    %788 = vmatpush1.msra.mxu0 %v565
    %789 = vmatprep.subr.mxu0 0.0
    %790 = vmatpush1.msra.mxu0 %v566
    %791 = vmatprep.subr.mxu0 0.0
    %792 = vmatpush1.msra.mxu0 %v567
    %793 = vmatprep.subr.mxu0 0.0
    %794 = vmatpush1.msra.mxu0 %v568
    %795 = vmatprep.subr.mxu0 0.0
    %796 = vmatpush1.msra.mxu0 %v569
    %797 = vmatprep.subr.mxu0 0.0
    %798 = vmatpush1.msra.mxu0 %v570
    %799 = vmatprep.subr.mxu0 0.0
    %800 = vmatpush1.msra.mxu0 %v571
    %801 = vmatprep.subr.mxu0 0.0
    %802 = vmatpush1.msra.mxu0 %v572
    %803 = vmatprep.subr.mxu0 0.0
    %804 = vmatpush1.msra.mxu0 %v573
    %805 = vmatprep.subr.mxu0 0.0
    %806 = vmatpush1.msra.mxu0 %v574
    %807 = vmatprep.subr.mxu0 0.0
    %808 = vmatpush1.msra.mxu0 %v575
    %809 = vmatprep.subr.mxu0 0.0
    %810 = vmatpush1.msra.mxu0 %v576
    %811 = vmatprep.subr.mxu0 0.0
    %812 = vmatpush1.msra.mxu0 %v577
    %813 = vmatprep.subr.mxu0 0.0
    %814 = vmatpush1.msra.mxu0 %v578
    %815 = vmatprep.subr.mxu0 0.0
    %816 = vmatpush1.msra.mxu0 %v579
    %817 = vmatprep.subr.mxu0 0.0
    %818 = vmatpush1.msra.mxu0 %v580
    %819 = vmatprep.mubr.f32.mxu0 %v482
    %820 = vmatmul.mubr.f32.gmra.mrb[0].mxu0 %v481
    %v821 = vpop.f32.mrb[0].mxu0
    %v822 = vadd.f32 %v752, %v821
    %v823 = vpop.f32.mrb[0].mxu0
    %824 = vdwg.mxu0
    %825 = vmatprep.subr.mxu0 0.0
    %826 = vmatpush1.msra.mxu0 %v581
    %827 = vmatprep.subr.mxu0 0.0
    %828 = vmatpush1.msra.mxu0 %v582
    %829 = vmatprep.subr.mxu0 0.0
    %830 = vmatpush1.msra.mxu0 %v583
    %831 = vmatprep.subr.mxu0 0.0
    %832 = vmatpush1.msra.mxu0 %v584
    %833 = vmatprep.subr.mxu0 0.0
    %834 = vmatpush1.msra.mxu0 %v585
    %835 = vmatprep.subr.mxu0 0.0
    %836 = vmatpush1.msra.mxu0 %v586
    %837 = vmatprep.subr.mxu0 0.0
    %838 = vmatpush1.msra.mxu0 %v587
    %839 = vmatprep.subr.mxu0 0.0
    %840 = vmatpush1.msra.mxu0 %v588
    %841 = vmatprep.subr.mxu0 0.0
    %842 = vmatpush1.msra.mxu0 %v589
    %843 = vmatprep.subr.mxu0 0.0
    %844 = vmatpush1.msra.mxu0 %v590
    %845 = vmatprep.subr.mxu0 0.0
    %846 = vmatpush1.msra.mxu0 %v591
    %847 = vmatprep.subr.mxu0 0.0
    %848 = vmatpush1.msra.mxu0 %v592
    %849 = vmatprep.subr.mxu0 0.0
    %850 = vmatpush1.msra.mxu0 %v593
    %851 = vmatprep.subr.mxu0 0.0
    %852 = vmatpush1.msra.mxu0 %v594
    %853 = vmatprep.subr.mxu0 0.0
    %854 = vmatpush1.msra.mxu0 %v595
    %855 = vmatprep.subr.mxu0 0.0
    %856 = vmatpush1.msra.mxu0 %v596
    %857 = vmatprep.subr.mxu0 0.0
    %858 = vmatpush1.msra.mxu0 %v597
    %859 = vmatprep.subr.mxu0 0.0
    %860 = vmatpush1.msra.mxu0 %v598
    %861 = vmatprep.subr.mxu0 0.0
    %862 = vmatpush1.msra.mxu0 %v599
    %863 = vmatprep.subr.mxu0 0.0
    %864 = vmatpush1.msra.mxu0 %v600
    %865 = vmatprep.subr.mxu0 0.0
    %866 = vmatpush1.msra.mxu0 %v601
    %867 = vmatprep.subr.mxu0 0.0
    %868 = vmatpush1.msra.mxu0 %v602
    %869 = vmatprep.subr.mxu0 0.0
    %870 = vmatpush1.msra.mxu0 %v603
    %871 = vmatprep.subr.mxu0 0.0
    %872 = vmatpush1.msra.mxu0 %v604
    %873 = vmatprep.subr.mxu0 0.0
    %874 = vmatpush1.msra.mxu0 %v605
    %875 = vmatprep.subr.mxu0 0.0
    %876 = vmatpush1.msra.mxu0 %v606
    %877 = vmatprep.subr.mxu0 0.0
    %878 = vmatpush1.msra.mxu0 %v607
    %879 = vmatprep.subr.mxu0 0.0
    %880 = vmatpush1.msra.mxu0 %v608
    %881 = vmatprep.subr.mxu0 0.0
    %882 = vmatpush1.msra.mxu0 %v609
    %883 = vmatprep.subr.mxu0 0.0
    %884 = vmatpush1.msra.mxu0 %v610
    %885 = vmatprep.subr.mxu0 0.0
    %886 = vmatpush1.msra.mxu0 %v611
    %887 = vmatprep.subr.mxu0 0.0
    %888 = vmatpush1.msra.mxu0 %v612
    %889 = vmatprep.mubr.f32.mxu0 %v484
    %890 = vmatmul.mubr.f32.gmra.mrb[0].mxu0 %v483
    %v891 = vpop.f32.mrb[0].mxu0
    %v892 = vadd.f32 %v822, %v891
    %v893 = vpop.f32.mrb[0].mxu0
    %894 = vdwg.mxu0
    %vm895 = vcmask 253952
    %896 = vst.msk [vmem:[#allocation3] sm:$0x1] %vm895, %v892
    // Predicated region
    $region22: #{tpu_custom_call.1} parent=1 // pred_check
      _
    $region23: #{tpu_custom_call.1} parent=1 // pred_check_branch
      %898 = sbr.rel (0) target = $region25
    $region24: #{tpu_custom_call.1} parent=1 // pred_region
      %s900 = ssub.s32 16, 16
      %901 = vsyncadd [#allocation4], %s900
      %s903 = sshll.u32 [#allocation3], 4
      %s904 = int_to_ptr.vmem [resolvable:$true] %s903
      %906 = dma.vmem_to_hbm [thread:$0]  %s904, 16, %s5, [#allocation4]
    $region25: #{tpu_custom_call.1} parent=1 // pred_fallthru
      _
    // Predicated region
    $region26: #{tpu_custom_call.1} parent=1 // pred_check
      _
    $region27: #{tpu_custom_call.1} parent=1 // pred_check_branch
      %908 = sbr.rel (0) target = $region29
    $region28: #{tpu_custom_call.1} parent=1 // pred_region
      %909 = dma.done [#allocation4], 16
    $region29: #{tpu_custom_call.1} parent=1 // pred_fallthru
      _
    %910 = vsyncpa [#allocation4], 1

</llo_original>
